<compile_context>
chip_gen: v5e
topology: v5e:2x2
jax: 0.10.0
libtpu: 0.0.40
codegen_flags: <defaults>
</compile_context>

<pallas_src>
import functools

import jax
import jax.numpy as jnp
from jax.experimental import pallas as pl
from jax.experimental.pallas import tpu as pltpu

BN_EPS = 1e-5
_LANE = 128
# Conservative guard that fits every generation's scoped-VMEM default
# (v5e: 16 MiB, v6e/v7x: 32 MiB); made explicit via vmem_limit_bytes below.
_VMEM_BUDGET_BYTES = 14 << 20
_VMEM_LIMIT_BYTES = 16 << 20


def _shared_layer_kernel(x_ref, wt_ref, p_ref, o_ref):
    """Fused (L+1)-layer Linear+BN(+ReLU) chain. Single invocation, no grid.

    x_ref : (B, Hp)      activations (VMEM)
    wt_ref: (L, Hp, Hp)  pre-transposed weights, layer-major (VMEM)
    p_ref : (L, 2, Hp)   packed [gamma, beta] per layer (VMEM; bias cancelled by BN)
    o_ref : (B, Hp)      output (VMEM)
    """
    n_layers = wt_ref.shape[0]
    inv_b = jnp.float32(1.0 / x_ref.shape[0])
    h = x_ref[...].astype(jnp.float32)          # layer-to-layer carry (traced value)

    # Static unrolled layer loop: full visibility for the LLO scheduler,
    # no dynamic predicates, no per-layer stores.  (48 weight vregs at
    # L=3, Hp=128 — fits the 64-vreg file; see TODO above for larger cases.)
    for l in range(n_layers):
        wt = wt_ref[l]                          # (Hp, Hp) = W^T
        params = p_ref[l]                       # (2, Hp)
        gamma = params[0:1, :]                  # (1, Hp)
        beta = params[1:2, :]                   # (1, Hp)

        # Linear (bias omitted: exactly cancelled by the BN mean subtraction).
        y = jnp.dot(h, wt, preferred_element_type=jnp.float32)

        # BatchNorm1d, training mode: batch mean, biased batch variance.
        # Two independent cross-sublane reductions (issue back-to-back).
        s1 = jnp.sum(y, axis=0, keepdims=True)          # (1, Hp)
        s2 = jnp.sum(y * y, axis=0, keepdims=True)      # (1, Hp)
        mean = s1 * inv_b
        var = jnp.maximum(s2 * inv_b - mean * mean, 0.0)
        scale = gamma * jax.lax.rsqrt(var + BN_EPS)     # (1, Hp) — gamma fused
        y = (y - mean) * scale + beta

        # ReLU on hidden layers only; the output layer has no activation.
        if l != n_layers - 1:
            y = jnp.maximum(y, 0.0)

        h = y

    o_ref[...] = h.astype(o_ref.dtype)          # single output store


def prepare_params(w_stack, g_stack, beta_stack):
    """One-time parameter preparation (NOT on the per-call path).

    w_stack   : (L, H, H)  nn.Linear weights (PyTorch layout, y = x @ W^T + b)
    g_stack   : (L, H)     BatchNorm1d gamma
    beta_stack: (L, H)     BatchNorm1d beta

    Returns (wt_p, params_p):
      wt_p    : (L, Hp, Hp) pre-transposed, zero-padded weights
      params_p: (L, 2, Hp)  packed, zero-padded [gamma, beta]
    The Linear bias is intentionally NOT needed: training-mode BN's mean
    subtraction cancels it exactly.
    """
    L, H, _ = w_stack.shape
    Hp = ((H + _LANE - 1) // _LANE) * _LANE
    pad = Hp - H

    wt = jnp.transpose(w_stack, (0, 2, 1))                 # (L, H, H) = W^T
    if pad:
        wt = jnp.pad(wt, ((0, 0), (0, pad), (0, pad)))
        g = jnp.pad(g_stack, ((0, 0), (0, pad)))           # padded gamma = 0
        beta = jnp.pad(beta_stack, ((0, 0), (0, pad)))     # padded beta  = 0
    else:
        g, beta = g_stack, beta_stack

    params = jnp.stack([g, beta], axis=1)                  # (L, 2, Hp)
    return wt, params


@jax.jit
def shared_layer_forward(x, wt_p, params_p):
    """x: (B, H) unpadded; wt_p/params_p from prepare_params (already padded)."""
    B, H = x.shape
    L, Hp, _ = wt_p.shape

    # Only the activations are padded per call (parameters are pre-padded).
    pad = Hp - H
    x_p = jnp.pad(x, ((0, 0), (0, pad))) if pad else x

    # Everything is VMEM-resident for this fused, grid-less kernel.
    vmem_bytes = 4 * (2 * B * Hp + L * Hp * Hp + L * 2 * Hp)
    assert vmem_bytes < _VMEM_BUDGET_BYTES, (
        "problem too large for the fused grid-less kernel; "
        "use a K-tiled layer grid instead")  # TODO(synk): tiled path for big H

    out_p = pl.pallas_call(
        _shared_layer_kernel,
        out_shape=jax.ShapeDtypeStruct((B, Hp), x.dtype),
        in_specs=[
            pl.BlockSpec(memory_space=pltpu.MemorySpace.VMEM),  # x
            pl.BlockSpec(memory_space=pltpu.MemorySpace.VMEM),  # W^T stack
            pl.BlockSpec(memory_space=pltpu.MemorySpace.VMEM),  # packed gamma/beta
        ],
        out_specs=pl.BlockSpec(memory_space=pltpu.MemorySpace.VMEM),
        compiler_params=pltpu.CompilerParams(
            vmem_limit_bytes=_VMEM_LIMIT_BYTES),
    )(x_p, wt_p, params_p)

    return out_p[:, :H]


def _reference_forward(x, w_stack, b_stack, g_stack, beta_stack):
    """Pure-JAX reference mirroring the PyTorch module (training-mode BN,
    with the Linear bias, two-pass variance)."""
    L = w_stack.shape[0]
    h = x
    for l in range(L):
        y = h @ w_stack[l].T + b_stack[l]
        mean = jnp.mean(y, axis=0, keepdims=True)
        var = jnp.mean((y - mean) ** 2, axis=0, keepdims=True)
        y = (y - mean) * jax.lax.rsqrt(var + BN_EPS) * g_stack[l] + beta_stack[l]
        if l != L - 1:
            y = jnp.maximum(y, 0.0)
        h = y
    return h


if __name__ == "__main__":
    # Module hyperparameters (activation = nn.ReLU; dropout unused in forward).
    num_hidden_layer = 2
    hidden_size = 32
    batch = 8
    n_layers = num_hidden_layer + 1

    key = jax.random.PRNGKey(0)
    kx, kw, kb = jax.random.split(key, 3)

    x = jax.random.normal(kx, (batch, hidden_size), dtype=jnp.float32)

    # Deterministic synthetic parameters (shapes per nn.Linear / nn.BatchNorm1d).
    bound = 1.0 / jnp.sqrt(hidden_size)
    w_stack = jax.random.uniform(
        kw, (n_layers, hidden_size, hidden_size),
        minval=-bound, maxval=bound, dtype=jnp.float32)
    b_stack = jax.random.uniform(
        kb, (n_layers, hidden_size),
        minval=-bound, maxval=bound, dtype=jnp.float32)
    g_stack = jnp.ones((n_layers, hidden_size), dtype=jnp.float32)       # BN gamma
    beta_stack = jnp.zeros((n_layers, hidden_size), dtype=jnp.float32)   # BN beta

    # One-time parameter preparation (pad + transpose + pack), off the call path.
    wt_p, params_p = prepare_params(w_stack, g_stack, beta_stack)
    wt_p, params_p = jax.block_until_ready((wt_p, params_p))

    out = shared_layer_forward(x, wt_p, params_p)
    out = jax.block_until_ready(out)

    # Reference includes the Linear bias; the kernel omits it because
    # training-mode BN cancels it exactly (ulp-level FP difference only).
    ref = _reference_forward(x, w_stack, b_stack, g_stack, beta_stack)
    assert out.shape == (batch, hidden_size)
    assert jnp.allclose(out, ref, atol=1e-4, rtol=1e-4), "mismatch vs reference"

    print("KERNEL_OK")
</pallas_src>

<mosaic_0001>
module attributes {stable_mosaic.version = 11 : i64} {
  func.func @_shared_layer_kernel(%arg0: memref<8x128xf32, #tpu.memory_space<vmem>>, %arg1: memref<3x128x128xf32, #tpu.memory_space<vmem>>, %arg2: memref<3x2x128xf32, #tpu.memory_space<vmem>>, %arg3: memref<8x128xf32, #tpu.memory_space<vmem>>) attributes {dimension_semantics = [], scalar_prefetch = 0 : i64, scratch_operands = 0 : i64, tpu.core_type = #tpu.core_type<tc>} {
    %c0 = arith.constant 0 : index
    %c0_0 = arith.constant 0 : index
    %0 = vector.load %arg0[%c0, %c0_0] : memref<8x128xf32, #tpu.memory_space<vmem>>, vector<8x128xf32>
    %c0_1 = arith.constant 0 : index
    %c0_2 = arith.constant 0 : index
    %c0_3 = arith.constant 0 : index
    %1 = vector.load %arg1[%c0_1, %c0_2, %c0_3] : memref<3x128x128xf32, #tpu.memory_space<vmem>>, vector<1x128x128xf32>
    %2 = vector.shape_cast %1 : vector<1x128x128xf32> to vector<128x128xf32>
    %c0_4 = arith.constant 0 : index
    %c0_5 = arith.constant 0 : index
    %c0_6 = arith.constant 0 : index
    %3 = vector.load %arg2[%c0_4, %c0_5, %c0_6] : memref<3x2x128xf32, #tpu.memory_space<vmem>>, vector<1x2x128xf32>
    %4 = vector.shape_cast %3 : vector<1x2x128xf32> to vector<2x128xf32>
    %5 = vector.extract_strided_slice %4 {offsets = [0, 0], sizes = [1, 128], strides = [1, 1]} : vector<2x128xf32> to vector<1x128xf32>
    %6 = vector.extract_strided_slice %4 {offsets = [1, 0], sizes = [1, 128], strides = [1, 1]} : vector<2x128xf32> to vector<1x128xf32>
    %cst = arith.constant dense<0.000000e+00> : vector<8x128xf32>
    %7 = tpu.matmul %0, %2, %cst {dimension_numbers = #tpu.dot_dimension_numbers<[1], [0], [0], [1], [0, 0, 1, 1], [], []>} : vector<8x128xf32>, vector<128x128xf32>, vector<8x128xf32> -> vector<8x128xf32>
    %cst_7 = arith.constant dense<0.000000e+00> : vector<128xf32>
    %8 = vector.multi_reduction <add>, %7, %cst_7 [0] : vector<8x128xf32> to vector<128xf32>
    %9 = vector.shape_cast %8 : vector<128xf32> to vector<1x128xf32>
    %10 = arith.mulf %7, %7 : vector<8x128xf32>
    %cst_8 = arith.constant dense<0.000000e+00> : vector<128xf32>
    %11 = vector.multi_reduction <add>, %10, %cst_8 [0] : vector<8x128xf32> to vector<128xf32>
    %12 = vector.shape_cast %11 : vector<128xf32> to vector<1x128xf32>
    %cst_9 = arith.constant 1.250000e-01 : f32
    %13 = vector.broadcast %cst_9 : f32 to vector<1x128xf32>
    %14 = arith.mulf %9, %13 : vector<1x128xf32>
    %cst_10 = arith.constant 1.250000e-01 : f32
    %15 = vector.broadcast %cst_10 : f32 to vector<1x128xf32>
    %16 = arith.mulf %12, %15 : vector<1x128xf32>
    %17 = arith.mulf %14, %14 : vector<1x128xf32>
    %18 = arith.subf %16, %17 : vector<1x128xf32>
    %cst_11 = arith.constant 0.000000e+00 : f32
    %19 = vector.broadcast %cst_11 : f32 to vector<1x128xf32>
    %20 = arith.maximumf %18, %19 : vector<1x128xf32>
    %cst_12 = arith.constant 9.99999974E-6 : f32
    %21 = vector.broadcast %cst_12 : f32 to vector<1x128xf32>
    %22 = arith.addf %20, %21 : vector<1x128xf32>
    %23 = math.rsqrt %22 : vector<1x128xf32>
    %24 = arith.mulf %5, %23 : vector<1x128xf32>
    %25 = vector.broadcast %14 : vector<1x128xf32> to vector<8x128xf32>
    %26 = arith.subf %7, %25 : vector<8x128xf32>
    %27 = vector.broadcast %24 : vector<1x128xf32> to vector<8x128xf32>
    %28 = arith.mulf %26, %27 : vector<8x128xf32>
    %29 = vector.broadcast %6 : vector<1x128xf32> to vector<8x128xf32>
    %30 = arith.addf %28, %29 : vector<8x128xf32>
    %cst_13 = arith.constant 0.000000e+00 : f32
    %31 = vector.broadcast %cst_13 : f32 to vector<8x128xf32>
    %32 = arith.maximumf %30, %31 : vector<8x128xf32>
    %c1 = arith.constant 1 : index
    %c0_14 = arith.constant 0 : index
    %c0_15 = arith.constant 0 : index
    %33 = vector.load %arg1[%c1, %c0_14, %c0_15] : memref<3x128x128xf32, #tpu.memory_space<vmem>>, vector<1x128x128xf32>
    %34 = vector.shape_cast %33 : vector<1x128x128xf32> to vector<128x128xf32>
    %c1_16 = arith.constant 1 : index
    %c0_17 = arith.constant 0 : index
    %c0_18 = arith.constant 0 : index
    %35 = vector.load %arg2[%c1_16, %c0_17, %c0_18] : memref<3x2x128xf32, #tpu.memory_space<vmem>>, vector<1x2x128xf32>
    %36 = vector.shape_cast %35 : vector<1x2x128xf32> to vector<2x128xf32>
    %37 = vector.extract_strided_slice %36 {offsets = [0, 0], sizes = [1, 128], strides = [1, 1]} : vector<2x128xf32> to vector<1x128xf32>
    %38 = vector.extract_strided_slice %36 {offsets = [1, 0], sizes = [1, 128], strides = [1, 1]} : vector<2x128xf32> to vector<1x128xf32>
    %cst_19 = arith.constant dense<0.000000e+00> : vector<8x128xf32>
    %39 = tpu.matmul %32, %34, %cst_19 {dimension_numbers = #tpu.dot_dimension_numbers<[1], [0], [0], [1], [0, 0, 1, 1], [], []>} : vector<8x128xf32>, vector<128x128xf32>, vector<8x128xf32> -> vector<8x128xf32>
    %cst_20 = arith.constant dense<0.000000e+00> : vector<128xf32>
    %40 = vector.multi_reduction <add>, %39, %cst_20 [0] : vector<8x128xf32> to vector<128xf32>
    %41 = vector.shape_cast %40 : vector<128xf32> to vector<1x128xf32>
    %42 = arith.mulf %39, %39 : vector<8x128xf32>
    %cst_21 = arith.constant dense<0.000000e+00> : vector<128xf32>
    %43 = vector.multi_reduction <add>, %42, %cst_21 [0] : vector<8x128xf32> to vector<128xf32>
    %44 = vector.shape_cast %43 : vector<128xf32> to vector<1x128xf32>
    %cst_22 = arith.constant 1.250000e-01 : f32
    %45 = vector.broadcast %cst_22 : f32 to vector<1x128xf32>
    %46 = arith.mulf %41, %45 : vector<1x128xf32>
    %cst_23 = arith.constant 1.250000e-01 : f32
    %47 = vector.broadcast %cst_23 : f32 to vector<1x128xf32>
    %48 = arith.mulf %44, %47 : vector<1x128xf32>
    %49 = arith.mulf %46, %46 : vector<1x128xf32>
    %50 = arith.subf %48, %49 : vector<1x128xf32>
    %cst_24 = arith.constant 0.000000e+00 : f32
    %51 = vector.broadcast %cst_24 : f32 to vector<1x128xf32>
    %52 = arith.maximumf %50, %51 : vector<1x128xf32>
    %cst_25 = arith.constant 9.99999974E-6 : f32
    %53 = vector.broadcast %cst_25 : f32 to vector<1x128xf32>
    %54 = arith.addf %52, %53 : vector<1x128xf32>
    %55 = math.rsqrt %54 : vector<1x128xf32>
    %56 = arith.mulf %37, %55 : vector<1x128xf32>
    %57 = vector.broadcast %46 : vector<1x128xf32> to vector<8x128xf32>
    %58 = arith.subf %39, %57 : vector<8x128xf32>
    %59 = vector.broadcast %56 : vector<1x128xf32> to vector<8x128xf32>
    %60 = arith.mulf %58, %59 : vector<8x128xf32>
    %61 = vector.broadcast %38 : vector<1x128xf32> to vector<8x128xf32>
    %62 = arith.addf %60, %61 : vector<8x128xf32>
    %cst_26 = arith.constant 0.000000e+00 : f32
    %63 = vector.broadcast %cst_26 : f32 to vector<8x128xf32>
    %64 = arith.maximumf %62, %63 : vector<8x128xf32>
    %c2 = arith.constant 2 : index
    %c0_27 = arith.constant 0 : index
    %c0_28 = arith.constant 0 : index
    %65 = vector.load %arg1[%c2, %c0_27, %c0_28] : memref<3x128x128xf32, #tpu.memory_space<vmem>>, vector<1x128x128xf32>
    %66 = vector.shape_cast %65 : vector<1x128x128xf32> to vector<128x128xf32>
    %c2_29 = arith.constant 2 : index
    %c0_30 = arith.constant 0 : index
    %c0_31 = arith.constant 0 : index
    %67 = vector.load %arg2[%c2_29, %c0_30, %c0_31] : memref<3x2x128xf32, #tpu.memory_space<vmem>>, vector<1x2x128xf32>
    %68 = vector.shape_cast %67 : vector<1x2x128xf32> to vector<2x128xf32>
    %69 = vector.extract_strided_slice %68 {offsets = [0, 0], sizes = [1, 128], strides = [1, 1]} : vector<2x128xf32> to vector<1x128xf32>
    %70 = vector.extract_strided_slice %68 {offsets = [1, 0], sizes = [1, 128], strides = [1, 1]} : vector<2x128xf32> to vector<1x128xf32>
    %cst_32 = arith.constant dense<0.000000e+00> : vector<8x128xf32>
    %71 = tpu.matmul %64, %66, %cst_32 {dimension_numbers = #tpu.dot_dimension_numbers<[1], [0], [0], [1], [0, 0, 1, 1], [], []>} : vector<8x128xf32>, vector<128x128xf32>, vector<8x128xf32> -> vector<8x128xf32>
    %cst_33 = arith.constant dense<0.000000e+00> : vector<128xf32>
    %72 = vector.multi_reduction <add>, %71, %cst_33 [0] : vector<8x128xf32> to vector<128xf32>
    %73 = vector.shape_cast %72 : vector<128xf32> to vector<1x128xf32>
    %74 = arith.mulf %71, %71 : vector<8x128xf32>
    %cst_34 = arith.constant dense<0.000000e+00> : vector<128xf32>
    %75 = vector.multi_reduction <add>, %74, %cst_34 [0] : vector<8x128xf32> to vector<128xf32>
    %76 = vector.shape_cast %75 : vector<128xf32> to vector<1x128xf32>
    %cst_35 = arith.constant 1.250000e-01 : f32
    %77 = vector.broadcast %cst_35 : f32 to vector<1x128xf32>
    %78 = arith.mulf %73, %77 : vector<1x128xf32>
    %cst_36 = arith.constant 1.250000e-01 : f32
    %79 = vector.broadcast %cst_36 : f32 to vector<1x128xf32>
    %80 = arith.mulf %76, %79 : vector<1x128xf32>
    %81 = arith.mulf %78, %78 : vector<1x128xf32>
    %82 = arith.subf %80, %81 : vector<1x128xf32>
    %cst_37 = arith.constant 0.000000e+00 : f32
    %83 = vector.broadcast %cst_37 : f32 to vector<1x128xf32>
    %84 = arith.maximumf %82, %83 : vector<1x128xf32>
    %cst_38 = arith.constant 9.99999974E-6 : f32
    %85 = vector.broadcast %cst_38 : f32 to vector<1x128xf32>
    %86 = arith.addf %84, %85 : vector<1x128xf32>
    %87 = math.rsqrt %86 : vector<1x128xf32>
    %88 = arith.mulf %69, %87 : vector<1x128xf32>
    %89 = vector.broadcast %78 : vector<1x128xf32> to vector<8x128xf32>
    %90 = arith.subf %71, %89 : vector<8x128xf32>
    %91 = vector.broadcast %88 : vector<1x128xf32> to vector<8x128xf32>
    %92 = arith.mulf %90, %91 : vector<8x128xf32>
    %93 = vector.broadcast %70 : vector<1x128xf32> to vector<8x128xf32>
    %94 = arith.addf %92, %93 : vector<8x128xf32>
    %c0_39 = arith.constant 0 : index
    %c0_40 = arith.constant 0 : index
    %95 = vector.load %arg3[%c0_39, %c0_40] : memref<8x128xf32, #tpu.memory_space<vmem>>, vector<8x128xf32>
    tpu.vector_store %arg3[%c0_39, %c0_40], %94 {strides = array<i32>} : memref<8x128xf32, #tpu.memory_space<vmem>>, vector<8x128xf32>,
    return
  }
}

</mosaic_0001>

<llo_original>
// kernel: shared_layer_forward.1
$region0: #{shared_layer_forward.1}
  #allocation0 [shape = 'u32[]', space=smem, size = 0x4, offset = 0x4, fixed_abs, tag = 'smem constant byte address 0x4 - core index']
  #allocation1 [shape = 'u32[72,128]{1,0:T(1,128)}', space=vmem, size = 0x9000, scoped, tag = 'internal scratch']
  %s0 = inlined_call_operand.vmem [shape: f32[8,128], index: 0, kind: input, shape index: {}]
  %s1 = inlined_call_operand.hbm [shape: f32[3,128,128], index: 1, kind: input, shape index: {}]
  %s2 = inlined_call_operand.vmem [shape: f32[3,2,128], index: 2, kind: input, shape index: {}]
  %s3 = inlined_call_operand.hbm [shape: f32[8,128], index: 3, kind: output, shape index: {}]
  %s4 = sld [smem:[#allocation0]]
  $region26: #{shared_layer_forward.1} parent=0
    _
  %s6 = ssub.s32 1, %s4
  %s7 = scalar_select 0, %s6, %s4
  $region1: #{shared_layer_forward.1} parent=0
    #allocation2 [shape = 'u8[196608]{0}', space=vmem, size = 0x30000, scoped, tag = 'input window, operand 1, single buffered']
    #allocation3 [shape = 's32[1]{0}', space=sflag, size = 0x4, scoped, tag = 'scoped memory for shared_layer_forward.1']
    #allocation4 [shape = 's32[1]{0}', space=sflag, size = 0x4, scoped, tag = 'scoped memory for shared_layer_forward.1']
    #allocation5 [shape = 'u8[4096]{0}', space=vmem, size = 0x1000, scoped, tag = 'output window, operand 0, single buffered']
    %8 = vsyncpa [#allocation3], 0
    %9 = vsyncpa [#allocation4], 0
    // Predicated region
    $region2: #{shared_layer_forward.1} parent=1 // pred_check
      _
    $region3: #{shared_layer_forward.1} parent=1 // pred_check_branch
      %11 = sbr.rel (0) target = $region5
    $region4: #{shared_layer_forward.1} parent=1 // pred_region
      _
    $region5: #{shared_layer_forward.1} parent=1 // pred_fallthru
      _
    // Predicated region
    $region6: #{shared_layer_forward.1} parent=1 // pred_check
      _
    $region7: #{shared_layer_forward.1} parent=1 // pred_check_branch
      %13 = sbr.rel (0) target = $region9
    $region8: #{shared_layer_forward.1} parent=1 // pred_region
      %15 = vsyncadd [#allocation3], 0
      %s16 = sshll.u32 %s1, 4
      %s17 = int_to_ptr.hbm [resolvable:$true] %s16
      %s18 = sshll.u32 [#allocation2], 4
      %s19 = int_to_ptr.vmem [resolvable:$true] %s18
      %24 = dma.hbm_to_vmem [thread:$0]  %s17, 6144, %s19, [#allocation3], 128, 128, 8
    $region9: #{shared_layer_forward.1} parent=1 // pred_fallthru
      _
    // Predicated region
    $region10: #{shared_layer_forward.1} parent=1 // pred_check
      _
    $region11: #{shared_layer_forward.1} parent=1 // pred_check_branch
      %26 = sbr.rel (0) target = $region13
    $region12: #{shared_layer_forward.1} parent=1 // pred_region
      _
    $region13: #{shared_layer_forward.1} parent=1 // pred_fallthru
      _
    // Predicated region
    $region14: #{shared_layer_forward.1} parent=1 // pred_check
      _
    $region15: #{shared_layer_forward.1} parent=1 // pred_check_branch
      %28 = sbr.rel (0) target = $region17
    $region16: #{shared_layer_forward.1} parent=1 // pred_region
      %30 = dma.done [#allocation3], 6144
    $region17: #{shared_layer_forward.1} parent=1 // pred_fallthru
      _
    %v31 = vld [vmem:[%s0] sm:$0xff]
    %v32 = vld [vmem:[#allocation2] sm:$0xff]
    %v33 = vld [vmem:[#allocation2 + $0x8] sm:$0xff]
    %v34 = vld [vmem:[#allocation2 + $0x10] sm:$0xff]
    %v35 = vld [vmem:[#allocation2 + $0x18] sm:$0xff]
    %v36 = vld [vmem:[#allocation2 + $0x20] sm:$0xff]
    %v37 = vld [vmem:[#allocation2 + $0x28] sm:$0xff]
    %v38 = vld [vmem:[#allocation2 + $0x30] sm:$0xff]
    %v39 = vld [vmem:[#allocation2 + $0x38] sm:$0xff]
    %v40 = vld [vmem:[#allocation2 + $0x40] sm:$0xff]
    %v41 = vld [vmem:[#allocation2 + $0x48] sm:$0xff]
    %v42 = vld [vmem:[#allocation2 + $0x50] sm:$0xff]
    %v43 = vld [vmem:[#allocation2 + $0x58] sm:$0xff]
    %v44 = vld [vmem:[#allocation2 + $0x60] sm:$0xff]
    %v45 = vld [vmem:[#allocation2 + $0x68] sm:$0xff]
    %v46 = vld [vmem:[#allocation2 + $0x70] sm:$0xff]
    %v47 = vld [vmem:[#allocation2 + $0x78] sm:$0xff]
    %v48 = vld [vmem:[%s2] sm:$0x3]
    %49 = vmatpush.msra.mxu0 %v47
    %50 = vmatpush.msra.mxu0 %v46
    %51 = vmatpush.msra.mxu0 %v45
    %52 = vmatpush.msra.mxu0 %v44
    %53 = vmatpush.msra.mxu0 %v43
    %54 = vmatpush.msra.mxu0 %v42
    %55 = vmatpush.msra.mxu0 %v41
    %56 = vmatpush.msra.mxu0 %v40
    %57 = vmatpush.msra.mxu0 %v39
    %58 = vmatpush.msra.mxu0 %v38
    %59 = vmatpush.msra.mxu0 %v37
    %60 = vmatpush.msra.mxu0 %v36
    %61 = vmatpush.msra.mxu0 %v35
    %62 = vmatpush.msra.mxu0 %v34
    %63 = vmatpush.msra.mxu0 %v33
    %64 = vmatpush.msra.mxu0 %v32
    %65 = vmatmul.f32.gmra.mxu0 %v31
    %v66 = vpop.f32.mrf.mxu0
    %v67 = vadd.f32 0.0, %v66
    %68 = vdwg.mxu0
    %v69 = vrot.slane %v67, 4
    %v70 = vadd.f32 %v67, %v69
    %v71 = vrot.slane %v70, 2
    %v72 = vadd.f32 %v70, %v71
    %v73 = vrot.slane %v72, 1
    %v74 = vadd.f32 %v72, %v73
    %v75 = vmul.f32 %v67, %v67
    %v76 = vrot.slane %v75, 4
    %v77 = vadd.f32 %v75, %v76
    %v78 = vrot.slane %v77, 2
    %v79 = vadd.f32 %v77, %v78
    %v80 = vrot.slane %v79, 1
    %v81 = vadd.f32 %v79, %v80
    %v82 = vmul.f32 %v74, 0.125
    %v83 = vmul.f32 %v81, 0.125
    %v84 = vmul.f32 %v82, %v82
    %v85 = vsub.f32 %v83, %v84
    %v86 = vmax.f32 %v85, 0.0
    %v87 = vadd.f32 %v86, 1e-05
    %v88 = vrsqrt.pop %v87
    %v89 = vmul.f32 %v88, %v87
    %v90 = vmul.f32 %v89, %v88
    %v91 = vmul.f32 0.5, %v90
    %v92 = vsub.f32 1.5, %v91
    %v93 = vmul.f32 %v88, %v92
    %vm94 = vweird.f32 %v87
    %vm95 = vweird.f32 %v88
    %vm96 = vmor %vm94, %vm95
    %v97 = vsel %vm96, %v88, %v93
    %v98 = vmul.f32 %v48, %v97
    %v99 = vsub.f32 %v67, %v82
    %v100 = vperm.slane %v98, 0
    %v101 = vmul.f32 %v99, %v100
    %v102 = vperm.slane %v48, 1
    %v103 = vadd.f32 %v101, %v102
    %v104 = vmax.f32 %v103, 0.0
    %s105 = scalar_lea.vmem [#allocation2], 128
    %v106 = vld [vmem:[%s105] sm:$0xff]
    %v107 = vld [vmem:[%s105 + $0x8] sm:$0xff]
    %v108 = vld [vmem:[%s105 + $0x10] sm:$0xff]
    %v109 = vld [vmem:[%s105 + $0x18] sm:$0xff]
    %v110 = vld [vmem:[%s105 + $0x20] sm:$0xff]
    %v111 = vld [vmem:[%s105 + $0x28] sm:$0xff]
    %v112 = vld [vmem:[%s105 + $0x30] sm:$0xff]
    %v113 = vld [vmem:[%s105 + $0x38] sm:$0xff]
    %v114 = vld [vmem:[%s105 + $0x40] sm:$0xff]
    %v115 = vld [vmem:[%s105 + $0x48] sm:$0xff]
    %v116 = vld [vmem:[%s105 + $0x50] sm:$0xff]
    %v117 = vld [vmem:[%s105 + $0x58] sm:$0xff]
    %v118 = vld [vmem:[%s105 + $0x60] sm:$0xff]
    %v119 = vld [vmem:[%s105 + $0x68] sm:$0xff]
    %v120 = vld [vmem:[%s105 + $0x70] sm:$0xff]
    %v121 = vld [vmem:[%s105 + $0x78] sm:$0xff]
    %s122 = scalar_lea.vmem %s2, 2
    %v123 = vld [vmem:[%s122] sm:$0x3]
    %124 = vmatpush.msra.mxu0 %v121
    %125 = vmatpush.msra.mxu0 %v120
    %126 = vmatpush.msra.mxu0 %v119
    %127 = vmatpush.msra.mxu0 %v118
    %128 = vmatpush.msra.mxu0 %v117
    %129 = vmatpush.msra.mxu0 %v116
    %130 = vmatpush.msra.mxu0 %v115
    %131 = vmatpush.msra.mxu0 %v114
    %132 = vmatpush.msra.mxu0 %v113
    %133 = vmatpush.msra.mxu0 %v112
    %134 = vmatpush.msra.mxu0 %v111
    %135 = vmatpush.msra.mxu0 %v110
    %136 = vmatpush.msra.mxu0 %v109
    %137 = vmatpush.msra.mxu0 %v108
    %138 = vmatpush.msra.mxu0 %v107
    %139 = vmatpush.msra.mxu0 %v106
    %140 = vmatmul.f32.gmra.mxu0 %v104
    %v141 = vpop.f32.mrf.mxu0
    %v142 = vadd.f32 0.0, %v141
    %143 = vdwg.mxu0
    %v144 = vrot.slane %v142, 4
    %v145 = vadd.f32 %v142, %v144
    %v146 = vrot.slane %v145, 2
    %v147 = vadd.f32 %v145, %v146
    %v148 = vrot.slane %v147, 1
    %v149 = vadd.f32 %v147, %v148
    %v150 = vmul.f32 %v142, %v142
    %v151 = vrot.slane %v150, 4
    %v152 = vadd.f32 %v150, %v151
    %v153 = vrot.slane %v152, 2
    %v154 = vadd.f32 %v152, %v153
    %v155 = vrot.slane %v154, 1
    %v156 = vadd.f32 %v154, %v155
    %v157 = vmul.f32 %v149, 0.125
    %v158 = vmul.f32 %v156, 0.125
    %v159 = vmul.f32 %v157, %v157
    %v160 = vsub.f32 %v158, %v159
    %v161 = vmax.f32 %v160, 0.0
    %v162 = vadd.f32 %v161, 1e-05
    %v163 = vrsqrt.pop %v162
    %v164 = vmul.f32 %v163, %v162
    %v165 = vmul.f32 %v164, %v163
    %v166 = vmul.f32 0.5, %v165
    %v167 = vsub.f32 1.5, %v166
    %v168 = vmul.f32 %v163, %v167
    %vm169 = vweird.f32 %v162
    %vm170 = vweird.f32 %v163
    %vm171 = vmor %vm169, %vm170
    %v172 = vsel %vm171, %v163, %v168
    %v173 = vmul.f32 %v123, %v172
    %v174 = vsub.f32 %v142, %v157
    %v175 = vperm.slane %v173, 0
    %v176 = vmul.f32 %v174, %v175
    %v177 = vperm.slane %v123, 1
    %v178 = vadd.f32 %v176, %v177
    %v179 = vmax.f32 %v178, 0.0
    %s180 = scalar_lea.vmem [#allocation2], 256
    %v181 = vld [vmem:[%s180] sm:$0xff]
    %v182 = vld [vmem:[%s180 + $0x8] sm:$0xff]
    %v183 = vld [vmem:[%s180 + $0x10] sm:$0xff]
    %v184 = vld [vmem:[%s180 + $0x18] sm:$0xff]
    %v185 = vld [vmem:[%s180 + $0x20] sm:$0xff]
    %v186 = vld [vmem:[%s180 + $0x28] sm:$0xff]
    %v187 = vld [vmem:[%s180 + $0x30] sm:$0xff]
    %v188 = vld [vmem:[%s180 + $0x38] sm:$0xff]
    %v189 = vld [vmem:[%s180 + $0x40] sm:$0xff]
    %v190 = vld [vmem:[%s180 + $0x48] sm:$0xff]
    %v191 = vld [vmem:[%s180 + $0x50] sm:$0xff]
    %v192 = vld [vmem:[%s180 + $0x58] sm:$0xff]
    %v193 = vld [vmem:[%s180 + $0x60] sm:$0xff]
    %v194 = vld [vmem:[%s180 + $0x68] sm:$0xff]
    %v195 = vld [vmem:[%s180 + $0x70] sm:$0xff]
    %v196 = vld [vmem:[%s180 + $0x78] sm:$0xff]
    %s197 = scalar_lea.vmem %s2, 4
    %v198 = vld [vmem:[%s197] sm:$0x3]
    %199 = vmatpush.msra.mxu0 %v196
    %200 = vmatpush.msra.mxu0 %v195
    %201 = vmatpush.msra.mxu0 %v194
    %202 = vmatpush.msra.mxu0 %v193
    %203 = vmatpush.msra.mxu0 %v192
    %204 = vmatpush.msra.mxu0 %v191
    %205 = vmatpush.msra.mxu0 %v190
    %206 = vmatpush.msra.mxu0 %v189
    %207 = vmatpush.msra.mxu0 %v188
    %208 = vmatpush.msra.mxu0 %v187
    %209 = vmatpush.msra.mxu0 %v186
    %210 = vmatpush.msra.mxu0 %v185
    %211 = vmatpush.msra.mxu0 %v184
    %212 = vmatpush.msra.mxu0 %v183
    %213 = vmatpush.msra.mxu0 %v182
    %214 = vmatpush.msra.mxu0 %v181
    %215 = vmatmul.f32.gmra.mxu0 %v179
    %v216 = vpop.f32.mrf.mxu0
    %v217 = vadd.f32 0.0, %v216
    %218 = vdwg.mxu0
    %v219 = vrot.slane %v217, 4
    %v220 = vadd.f32 %v217, %v219
    %v221 = vrot.slane %v220, 2
    %v222 = vadd.f32 %v220, %v221
    %v223 = vrot.slane %v222, 1
    %v224 = vadd.f32 %v222, %v223
    %v225 = vmul.f32 %v217, %v217
    %v226 = vrot.slane %v225, 4
    %v227 = vadd.f32 %v225, %v226
    %v228 = vrot.slane %v227, 2
    %v229 = vadd.f32 %v227, %v228
    %v230 = vrot.slane %v229, 1
    %v231 = vadd.f32 %v229, %v230
    %v232 = vmul.f32 %v224, 0.125
    %v233 = vmul.f32 %v231, 0.125
    %v234 = vmul.f32 %v232, %v232
    %v235 = vsub.f32 %v233, %v234
    %v236 = vmax.f32 %v235, 0.0
    %v237 = vadd.f32 %v236, 1e-05
    %v238 = vrsqrt.pop %v237
    %v239 = vmul.f32 %v238, %v237
    %v240 = vmul.f32 %v239, %v238
    %v241 = vmul.f32 0.5, %v240
    %v242 = vsub.f32 1.5, %v241
    %v243 = vmul.f32 %v238, %v242
    %vm244 = vweird.f32 %v237
    %vm245 = vweird.f32 %v238
    %vm246 = vmor %vm244, %vm245
    %v247 = vsel %vm246, %v238, %v243
    %v248 = vmul.f32 %v198, %v247
    %v249 = vsub.f32 %v217, %v232
    %v250 = vperm.slane %v248, 0
    %v251 = vmul.f32 %v249, %v250
    %v252 = vperm.slane %v198, 1
    %v253 = vadd.f32 %v251, %v252
    %254 = vst [vmem:[#allocation5] sm:$0xff] %v253
    // Predicated region
    $region18: #{shared_layer_forward.1} parent=1 // pred_check
      _
    $region19: #{shared_layer_forward.1} parent=1 // pred_check_branch
      %256 = sbr.rel (0) target = $region21
    $region20: #{shared_layer_forward.1} parent=1 // pred_region
      %258 = vsyncadd [#allocation4], 0
      %s260 = sshll.u32 [#allocation5], 4
      %s261 = int_to_ptr.vmem [resolvable:$true] %s260
      %s262 = sshll.u32 %s3, 4
      %s263 = int_to_ptr.hbm [resolvable:$true] %s262
      %265 = dma.vmem_to_hbm [thread:$0]  %s261, 128, %s263, [#allocation4]
    $region21: #{shared_layer_forward.1} parent=1 // pred_fallthru
      _
    // Predicated region
    $region22: #{shared_layer_forward.1} parent=1 // pred_check
      _
    $region23: #{shared_layer_forward.1} parent=1 // pred_check_branch
      %267 = sbr.rel (0) target = $region25
    $region24: #{shared_layer_forward.1} parent=1 // pred_region
      %269 = dma.done [#allocation4], 128
    $region25: #{shared_layer_forward.1} parent=1 // pred_fallthru
      _
    %270 = vsyncpa [#allocation3], 1
    %271 = vsyncpa [#allocation4], 1

</llo_original>
